<compile_context>
chip_gen: v7x
topology: tpu7x:2x2x1
jax: 0.10.0
libtpu: 0.0.40
codegen_flags: <defaults>
</compile_context>

<pallas_src>
import functools
import math

import jax
import jax.numpy as jnp
from jax.experimental import pallas as pl
from jax.experimental.pallas import tpu as pltpu


# --- VMEM planning ----------------------------------------------------------
# v7x has only 64 MiB physical VMEM per TensorCore, so plan against ~40 MiB
# (2 inputs x 2 pipeline buffers x block  +  ~4 f32-sized temporaries + mask
# slack) and raise the scoped limit to 48 MiB.  v5e/v6e (128 MiB physical) are
# trivially fine with the same numbers.
_VMEM_LIMIT_BYTES = 48 * 1024 * 1024
_VMEM_PLAN_BYTES = 40 * 1024 * 1024
_ROW_TILE_CAP = 1024      # keep all rows in one tile up to this many rows
_ROW_TILE = 512           # row-tile size (multiple of 8) for very large N*C


def _pick_tiles(rows, hw, itemsize):
    """Pick (tile_r, tile_hw), dtype-aware, no divisibility requirement.

    Bytes planned per block element:
      pipeline: 2 inputs * 2 buffers * itemsize
      temps:    ~4 f32 arrays (casts / product / sum) + iota/mask slack
    """
    tile_r = rows if rows <= _ROW_TILE_CAP else _ROW_TILE

    per_elem = 4 * itemsize + 24
    e_max = _VMEM_PLAN_BYTES // per_elem          # elements per block budget

    if hw < 128:
        tile_hw = hw                              # short lane dim -> full dim
    else:
        budget_lanes = max(128, (e_max // max(tile_r, 1)) // 128 * 128)
        tile_hw = max(128, min((hw // 128) * 128, budget_lanes))
    return tile_r, tile_hw


def _dice_partial_kernel(pred_ref, targ_ref, inter_ref, sums_ref, *,
                         rows, hw, tile_r, tile_hw, mask_rows, mask_cols):
    """One grid step = one (row tile, spatial tile).

    pred_ref / targ_ref: (tile_r, tile_hw) VMEM tiles (native dtype).
    inter_ref / sums_ref: (tile_r, 1) f32 accumulators, resident across the
    hw ("arbitrary", innermost) grid axis.
    """
    h = pl.program_id(1)

    @pl.when(h == 0)
    def _init():
        inter_ref[...] = jnp.zeros_like(inter_ref)
        sums_ref[...] = jnp.zeros_like(sums_ref)

    p = pred_ref[...].astype(jnp.float32)
    t = targ_ref[...].astype(jnp.float32)

    # Mask the ragged tails of partial blocks (OOB VMEM contents are garbage).
    if mask_rows or mask_cols:
        mask = None
        if mask_cols:
            col = jax.lax.broadcasted_iota(jnp.int32, (tile_r, tile_hw), 1)
            mask = (col + h * tile_hw) < hw
        if mask_rows:
            r = pl.program_id(0)
            row = jax.lax.broadcasted_iota(jnp.int32, (tile_r, tile_hw), 0)
            rmask = (row + r * tile_r) < rows
            mask = rmask if mask is None else (mask & rmask)
        p = jnp.where(mask, p, 0.0)
        t = jnp.where(mask, t, 0.0)

    # Two cross-lane reductions (not three): denominator only needs sum(p+t).
    inter_ref[...] += jnp.sum(p * t, axis=1, keepdims=True)
    sums_ref[...] += jnp.sum(p + t, axis=1, keepdims=True)


def multiclass_dice_loss(prediction, target, weights=None):
    """Pallas implementation of MultiClassDiceLoss.forward (NCHW-style inputs)."""
    assert prediction.shape == target.shape
    N, C = int(prediction.shape[0]), int(prediction.shape[1])
    HW = int(math.prod(prediction.shape[2:]))
    R = N * C

    # Free, contiguous reshape: (N, C, spatial...) -> (N*C, HW).
    p2 = prediction.reshape(R, HW)
    t2 = target.reshape(R, HW)

    itemsize = jnp.dtype(prediction.dtype).itemsize
    tile_r, tile_hw = _pick_tiles(R, HW, itemsize)

    n_row_tiles = pl.cdiv(R, tile_r)
    n_hw_tiles = pl.cdiv(HW, tile_hw)
    r_pad = n_row_tiles * tile_r          # only the (tiny) outputs are padded
    mask_rows = (r_pad != R)
    mask_cols = (HW % tile_hw) != 0

    kernel = functools.partial(
        _dice_partial_kernel,
        rows=R, hw=HW, tile_r=tile_r, tile_hw=tile_hw,
        mask_rows=mask_rows, mask_cols=mask_cols)

    out_shape = (
        jax.ShapeDtypeStruct((r_pad, 1), jnp.float32),   # per-row sum(p*t)
        jax.ShapeDtypeStruct((r_pad, 1), jnp.float32),   # per-row sum(p+t)
    )

    inter, sums = pl.pallas_call(
        kernel,
        out_shape=out_shape,
        grid_spec=pltpu.PrefetchScalarGridSpec(
            num_scalar_prefetch=0,
            grid=(n_row_tiles, n_hw_tiles),
            in_specs=[
                pl.BlockSpec((tile_r, tile_hw), lambda r, h: (r, h)),
                pl.BlockSpec((tile_r, tile_hw), lambda r, h: (r, h)),
            ],
            out_specs=[
                pl.BlockSpec((tile_r, 1), lambda r, h: (r, 0)),
                pl.BlockSpec((tile_r, 1), lambda r, h: (r, 0)),
            ],
        ),
        compiler_params=pltpu.CompilerParams(
            # Row tiles are independent -> "parallel" (megacore on v7x);
            # hw is the reduction axis for the resident accumulators.
            dimension_semantics=("parallel", "arbitrary"),
            vmem_limit_bytes=_VMEM_LIMIT_BYTES),
    )(p2, t2)

    # O(C) epilogue in plain JAX: fold batch, dice, weights, total.
    inter_c = inter[:R, 0].reshape(N, C).sum(axis=0)     # (C,)
    sums_c = sums[:R, 0].reshape(N, C).sum(axis=0)       # (C,)

    smooth = jnp.float32(1.0)
    dice = (2.0 * inter_c + smooth) / (sums_c + smooth)
    loss_c = 1.0 - dice / jnp.float32(N)
    if weights is not None:
        loss_c = loss_c * jnp.asarray(weights, dtype=jnp.float32)
    return jnp.sum(loss_c)


def _reference(prediction, target, weights=None):
    """Pure-JAX reference matching the PyTorch module exactly."""
    N, C = prediction.shape[0], prediction.shape[1]
    total = jnp.float32(0.0)
    for i in range(C):
        pf = prediction[:, i].reshape(N, -1).astype(jnp.float32)
        tf = target[:, i].reshape(N, -1).astype(jnp.float32)
        inter = jnp.sum(pf * tf)
        loss = (2.0 * inter + 1.0) / (jnp.sum(pf) + jnp.sum(tf) + 1.0)
        loss = 1.0 - loss / N
        if weights is not None:
            loss = loss * weights[i]
        total = total + loss
    return total


def _make_inputs(key, N, C, H, W, dtype=jnp.float32):
    k1, k2 = jax.random.split(key)
    prediction = jax.nn.softmax(
        jax.random.normal(k1, (N, C, H, W), dtype=jnp.float32), axis=1)
    labels = jax.random.randint(k2, (N, H, W), 0, C)
    target = jax.nn.one_hot(labels, C, dtype=jnp.float32)   # (N, H, W, C)
    target = jnp.transpose(target, (0, 3, 1, 2))             # NCHW
    return prediction.astype(dtype), target.astype(dtype)


if __name__ == "__main__":
    key = jax.random.PRNGKey(0)
    k_a, k_b = jax.random.split(key)

    # Case 1: (2, 4, 16, 16) f32, with and without per-class weights.
    pred, targ = _make_inputs(k_a, 2, 4, 16, 16)
    loss = jax.block_until_ready(multiclass_dice_loss(pred, targ))
    ref = _reference(pred, targ)
    assert jnp.allclose(loss, ref, rtol=1e-5, atol=1e-5), (loss, ref)

    weights = jnp.array([0.1, 0.2, 0.3, 0.4], dtype=jnp.float32)
    loss_w = jax.block_until_ready(multiclass_dice_loss(pred, targ, weights))
    ref_w = _reference(pred, targ, weights)
    assert jnp.allclose(loss_w, ref_w, rtol=1e-5, atol=1e-5), (loss_w, ref_w)

    # Case 2: awkward spatial size (HW = 13*11 = 143, not a multiple of 128)
    # exercises the cdiv grid + in-kernel tail masking (no wrapper padding).
    pred2, targ2 = _make_inputs(k_b, 2, 3, 13, 11)
    loss2 = jax.block_until_ready(multiclass_dice_loss(pred2, targ2))
    ref2 = _reference(pred2, targ2)
    assert jnp.allclose(loss2, ref2, rtol=1e-5, atol=1e-5), (loss2, ref2)

    print("KERNEL_OK")
</pallas_src>

<mosaic_0001>
module attributes {stable_mosaic.version = 11 : i64} {
  func.func @_dice_partial_kernel(%arg0: i32, %arg1: i32, %arg2: memref<8x256xf32, #tpu.memory_space<vmem>>, %arg3: memref<8x256xf32, #tpu.memory_space<vmem>>, %arg4: memref<8x1xf32, #tpu.memory_space<vmem>>, %arg5: memref<8x1xf32, #tpu.memory_space<vmem>>) attributes {dimension_semantics = [#tpu.dimension_semantics<parallel>, #tpu.dimension_semantics<arbitrary>], iteration_bounds = array<i64: 1, 1>, scalar_prefetch = 0 : i64, scratch_operands = 0 : i64, tpu.core_type = #tpu.core_type<tc>, window_params = [{transform_indices = @transform_0, window_bounds = array<i64: 8, 256>}, {transform_indices = @transform_1, window_bounds = array<i64: 8, 256>}, {transform_indices = @transform_2, window_bounds = array<i64: 8, 1>}, {transform_indices = @transform_3, window_bounds = array<i64: 8, 1>}]} {
    %c0_i32 = arith.constant 0 : i32
    %0 = arith.cmpi eq, %arg1, %c0_i32 : i32
    %1 = arith.extui %0 : i1 to i32
    %c0_i32_0 = arith.constant 0 : i32
    %2 = arith.cmpi ne, %1, %c0_i32_0 : i32
    scf.if %2 {
      %cst_13 = arith.constant 0.000000e+00 : f32
      %17 = vector.broadcast %cst_13 : f32 to vector<8x1xf32>
      %c0_14 = arith.constant 0 : index
      %c0_15 = arith.constant 0 : index
      %18 = vector.load %arg4[%c0_14, %c0_15] : memref<8x1xf32, #tpu.memory_space<vmem>>, vector<8x1xf32>
      tpu.vector_store %arg4[%c0_14, %c0_15], %17 {strides = array<i32>} : memref<8x1xf32, #tpu.memory_space<vmem>>, vector<8x1xf32>,
      %cst_16 = arith.constant 0.000000e+00 : f32
      %19 = vector.broadcast %cst_16 : f32 to vector<8x1xf32>
      %c0_17 = arith.constant 0 : index
      %c0_18 = arith.constant 0 : index
      %20 = vector.load %arg5[%c0_17, %c0_18] : memref<8x1xf32, #tpu.memory_space<vmem>>, vector<8x1xf32>
      tpu.vector_store %arg5[%c0_17, %c0_18], %19 {strides = array<i32>} : memref<8x1xf32, #tpu.memory_space<vmem>>, vector<8x1xf32>,
    } else {
    }
    %c0 = arith.constant 0 : index
    %c0_1 = arith.constant 0 : index
    %3 = vector.load %arg2[%c0, %c0_1] : memref<8x256xf32, #tpu.memory_space<vmem>>, vector<8x256xf32>
    %c0_2 = arith.constant 0 : index
    %c0_3 = arith.constant 0 : index
    %4 = vector.load %arg3[%c0_2, %c0_3] : memref<8x256xf32, #tpu.memory_space<vmem>>, vector<8x256xf32>
    %c0_4 = arith.constant 0 : index
    %c0_5 = arith.constant 0 : index
    %5 = vector.load %arg4[%c0_4, %c0_5] : memref<8x1xf32, #tpu.memory_space<vmem>>, vector<8x1xf32>
    %6 = arith.mulf %3, %4 : vector<8x256xf32>
    %cst = arith.constant dense<0.000000e+00> : vector<8xf32>
    %7 = vector.multi_reduction <add>, %6, %cst [1] : vector<8x256xf32> to vector<8xf32>
    %8 = vector.shape_cast %7 : vector<8xf32> to vector<8x1xf32>
    %9 = arith.addf %5, %8 : vector<8x1xf32>
    %c0_6 = arith.constant 0 : index
    %c0_7 = arith.constant 0 : index
    %10 = vector.load %arg4[%c0_6, %c0_7] : memref<8x1xf32, #tpu.memory_space<vmem>>, vector<8x1xf32>
    tpu.vector_store %arg4[%c0_6, %c0_7], %9 {strides = array<i32>} : memref<8x1xf32, #tpu.memory_space<vmem>>, vector<8x1xf32>,
    %c0_8 = arith.constant 0 : index
    %c0_9 = arith.constant 0 : index
    %11 = vector.load %arg5[%c0_8, %c0_9] : memref<8x1xf32, #tpu.memory_space<vmem>>, vector<8x1xf32>
    %12 = arith.addf %3, %4 : vector<8x256xf32>
    %cst_10 = arith.constant dense<0.000000e+00> : vector<8xf32>
    %13 = vector.multi_reduction <add>, %12, %cst_10 [1] : vector<8x256xf32> to vector<8xf32>
    %14 = vector.shape_cast %13 : vector<8xf32> to vector<8x1xf32>
    %15 = arith.addf %11, %14 : vector<8x1xf32>
    %c0_11 = arith.constant 0 : index
    %c0_12 = arith.constant 0 : index
    %16 = vector.load %arg5[%c0_11, %c0_12] : memref<8x1xf32, #tpu.memory_space<vmem>>, vector<8x1xf32>
    tpu.vector_store %arg5[%c0_11, %c0_12], %15 {strides = array<i32>} : memref<8x1xf32, #tpu.memory_space<vmem>>, vector<8x1xf32>,
    return
  }
  func.func @transform_0(%arg0: i32, %arg1: i32) -> (i32, i32) {
    %c0_i32 = arith.constant 0 : i32
    return %arg0, %arg1 : i32, i32
  }
  func.func @transform_1(%arg0: i32, %arg1: i32) -> (i32, i32) {
    %c0_i32 = arith.constant 0 : i32
    return %arg0, %arg1 : i32, i32
  }
  func.func @transform_2(%arg0: i32, %arg1: i32) -> (i32, i32) {
    %c0_i32 = arith.constant 0 : i32
    %c0_i32_0 = arith.constant 0 : i32
    return %arg0, %c0_i32 : i32, i32
  }
  func.func @transform_3(%arg0: i32, %arg1: i32) -> (i32, i32) {
    %c0_i32 = arith.constant 0 : i32
    %c0_i32_0 = arith.constant 0 : i32
    return %arg0, %c0_i32 : i32, i32
  }
}

</mosaic_0001>

<llo_original>
// kernel: tpu_custom_call.1
$region0: #{tpu_custom_call.1}
  #allocation0 [shape = 'u32[]', space=smem, size = 0x4, offset = 0x4, fixed_abs, tag = 'smem constant byte address 0x4 - core index']
  #allocation1 [shape = 'u32[144,128]{1,0:T(1,128)}', space=vmem, size = 0x12000, scoped, tag = 'internal scratch']
  %s0 = inlined_call_operand.hbm [shape: f32[8,256], index: 0, kind: input, shape index: {}]
  %s1 = inlined_call_operand.hbm [shape: f32[8,256], index: 1, kind: input, shape index: {}]
  %s2 = inlined_call_operand.vmem [shape: f32[8,1], index: 2, kind: output, shape index: {0}]
  %s3 = inlined_call_operand.vmem [shape: f32[8,1], index: 3, kind: output, shape index: {1}]
  %4 = xla_tuple %s2, %s3
  %s5 = sld [smem:[#allocation0]]
  $region38: #{tpu_custom_call.1} parent=0
    _
  %s7 = ssub.s32 1, %s5
  %s8 = scalar_select 0, %s7, %s5
  $region1: #{tpu_custom_call.1} parent=0
    #allocation2 [shape = 'u8[8192]{0}', space=vmem, size = 0x2000, scoped, tag = 'input window, operand 0, single buffered']
    #allocation3 [shape = 's32[1]{0}', space=sflag, size = 0x4, scoped, tag = 'scoped memory for tpu_custom_call.1']
    #allocation4 [shape = 'u8[8192]{0}', space=vmem, size = 0x2000, scoped, tag = 'input window, operand 1, single buffered']
    #allocation5 [shape = 's32[1]{0}', space=sflag, size = 0x4, scoped, tag = 'scoped memory for tpu_custom_call.1']
    %9 = vsyncpa [#allocation3], 0
    %10 = vsyncpa [#allocation5], 0
    // Predicated region
    $region2: #{tpu_custom_call.1} parent=1 // pred_check
      _
    $region3: #{tpu_custom_call.1} parent=1 // pred_check_branch
      %12 = sbr.rel (0) target = $region5
    $region4: #{tpu_custom_call.1} parent=1 // pred_region
      %s14 = ssub.s32 256, 256
      %15 = vsyncadd [#allocation3], %s14
      %s17 = sshll.u32 [#allocation2], 4
      %s18 = int_to_ptr.vmem [resolvable:$true] %s17
      %20 = dma.hbm_to_vmem [thread:$0]  %s0, 256, %s18, [#allocation3]
    $region5: #{tpu_custom_call.1} parent=1 // pred_fallthru
      _
    // Predicated region
    $region6: #{tpu_custom_call.1} parent=1 // pred_check
      _
    $region7: #{tpu_custom_call.1} parent=1 // pred_check_branch
      %22 = sbr.rel (0) target = $region9
    $region8: #{tpu_custom_call.1} parent=1 // pred_region
      %s24 = ssub.s32 256, 256
      %25 = vsyncadd [#allocation5], %s24
      %s27 = sshll.u32 [#allocation4], 4
      %s28 = int_to_ptr.vmem [resolvable:$true] %s27
      %30 = dma.hbm_to_vmem [thread:$0]  %s1, 256, %s28, [#allocation5]
    $region9: #{tpu_custom_call.1} parent=1 // pred_fallthru
      _
    // Predicated region
    $region10: #{tpu_custom_call.1} parent=1 // pred_check
      _
    $region11: #{tpu_custom_call.1} parent=1 // pred_check_branch
      %32 = sbr.rel (0) target = $region13
    $region12: #{tpu_custom_call.1} parent=1 // pred_region
      %33 = dma.done [#allocation3], 256
    $region13: #{tpu_custom_call.1} parent=1 // pred_fallthru
      _
    // Predicated region
    $region14: #{tpu_custom_call.1} parent=1 // pred_check
      _
    $region15: #{tpu_custom_call.1} parent=1 // pred_check_branch
      %35 = sbr.rel (0) target = $region17
    $region16: #{tpu_custom_call.1} parent=1 // pred_region
      %36 = dma.done [#allocation5], 256
    $region17: #{tpu_custom_call.1} parent=1 // pred_fallthru
      _
    %p37 = scmp.eq.s32.totalorder 0, 0
    // Predicated region
    $region18: #{tpu_custom_call.1} parent=1 // pred_check
      %p38 = pneg %p37
    $region19: #{tpu_custom_call.1} parent=1 // pred_check_branch
      %40 = sbr.rel (%p38) target = $region21
    $region20: #{tpu_custom_call.1} parent=1 // pred_region
      %vm41 = vcmask 7168
      %42 = vst.msk [vmem:[%s2] sm:$0xff] %vm41, 0.0
      %43 = vst.msk [vmem:[%s3] sm:$0xff] %vm41, 0.0
    $region21: #{tpu_custom_call.1} parent=1 // pred_fallthru
      _
    %v44 = vld [vmem:[#allocation2] sm:$0xff]
    %v45 = vld [vmem:[#allocation2 + $0x8] sm:$0xff]
    %v46 = vld [vmem:[#allocation4] sm:$0xff]
    %v47 = vld [vmem:[#allocation4 + $0x8] sm:$0xff]
    %v48 = vld [vmem:[%s2] sm:$0xff]
    %v49 = vmul.f32 %v44, %v46
    %v50 = vmul.f32 %v45, %v47
    %v51 = vadd.f32 %v49, %v50
    %52 = vadd.xlane.f32.xlu0 %v51
    %v53 = vpop.xlane.xlu0 %52
    %v54 = vadd.f32 %v48, %v53
    %vm55 = vcmask 7168
    %56 = vst.msk [vmem:[%s2] sm:$0xff] %vm55, %v54
    %v57 = vld [vmem:[%s3] sm:$0xff]
    %v58 = vadd.f32 %v44, %v46
    %v59 = vadd.f32 %v45, %v47
    %v60 = vadd.f32 %v58, %v59
    %61 = vadd.xlane.f32.xlu0 %v60
    %v62 = vpop.xlane.xlu0 %61
    %v63 = vadd.f32 %v57, %v62
    %64 = vst.msk [vmem:[%s3] sm:$0xff] %vm55, %v63
    // Predicated region
    $region22: #{tpu_custom_call.1} parent=1 // pred_check
      _
    $region23: #{tpu_custom_call.1} parent=1 // pred_check_branch
      %66 = sbr.rel (0) target = $region25
    $region24: #{tpu_custom_call.1} parent=1 // pred_region
      _
    $region25: #{tpu_custom_call.1} parent=1 // pred_fallthru
      _
    // Predicated region
    $region26: #{tpu_custom_call.1} parent=1 // pred_check
      _
    $region27: #{tpu_custom_call.1} parent=1 // pred_check_branch
      %68 = sbr.rel (0) target = $region29
    $region28: #{tpu_custom_call.1} parent=1 // pred_region
      _
    $region29: #{tpu_custom_call.1} parent=1 // pred_fallthru
      _
    // Predicated region
    $region30: #{tpu_custom_call.1} parent=1 // pred_check
      _
    $region31: #{tpu_custom_call.1} parent=1 // pred_check_branch
      %70 = sbr.rel (0) target = $region33
    $region32: #{tpu_custom_call.1} parent=1 // pred_region
      _
    $region33: #{tpu_custom_call.1} parent=1 // pred_fallthru
      _
    // Predicated region
    $region34: #{tpu_custom_call.1} parent=1 // pred_check
      _
    $region35: #{tpu_custom_call.1} parent=1 // pred_check_branch
      %72 = sbr.rel (0) target = $region37
    $region36: #{tpu_custom_call.1} parent=1 // pred_region
      _
    $region37: #{tpu_custom_call.1} parent=1 // pred_fallthru
      _
    %73 = vsyncpa [#allocation3], 1
    %74 = vsyncpa [#allocation5], 1

</llo_original>
